<compile_context>
chip_gen: v6e
topology: v6e:2x2x1
jax: 0.10.0
libtpu: 0.0.40
codegen_flags: <defaults>
</compile_context>

<pallas_src>
import functools

import jax
import jax.numpy as jnp
from jax.experimental import pallas as pl
from jax.experimental.pallas import tpu as pltpu

LANE = 128        # TPU vreg lane width
SUBLANE = 8       # f32 sublane packing
MAX_BATCH_TILE = 4096   # sweep 2048/4096/8192; footprint stays far under scoped VMEM

# Set to jax.lax.Precision.HIGHEST for exact-f32 (PyTorch-parity) matmuls;
# the TPU default matches to ~1e-5 and is faster.
MATMUL_PRECISION = None


def _round_up(x, m):
    return (x + m - 1) // m * m


def _sublane_pack(dtype):
    """Sublane packing for a dtype: 8 (32-bit), 16 (16-bit), 32 (8-bit)."""
    return 32 // jnp.dtype(dtype).itemsize


# ---------------------------------------------------------------------------
# Kernels
# ---------------------------------------------------------------------------
def _qvalues(x_ref, w_ref, b_ref, *, s_pad, n_pad):
    """Fused 3-layer MLP on one VMEM-resident batch tile -> (TB, n_pad) f32."""
    wdt = w_ref.dtype
    b = b_ref[...].astype(jnp.float32)          # (3, n_pad), stays f32 on the VPU

    x = x_ref[...].astype(wdt)                  # (TB, s_pad)
    h = jnp.dot(x, w_ref[0, :s_pad, :],
                preferred_element_type=jnp.float32, precision=MATMUL_PRECISION)
    h = jnp.maximum(h + b[0:1, :], 0.0)

    h = jnp.dot(h.astype(wdt), w_ref[1, :n_pad, :],
                preferred_element_type=jnp.float32, precision=MATMUL_PRECISION)
    h = jnp.maximum(h + b[1:2, :], 0.0)

    q = jnp.dot(h.astype(wdt), w_ref[2, :n_pad, :],
                preferred_element_type=jnp.float32, precision=MATMUL_PRECISION)
    return q + b[2:3, :]


def _mlp_kernel(x_ref, w_ref, b_ref, q_ref, *, s_pad, n_pad):
    q_ref[...] = _qvalues(x_ref, w_ref, b_ref,
                          s_pad=s_pad, n_pad=n_pad).astype(q_ref.dtype)


def _select_action_kernel(x_ref, w_ref, b_ref, a_ref, *, s_pad, n_pad, action_size):
    q = _qvalues(x_ref, w_ref, b_ref, s_pad=s_pad, n_pad=n_pad)   # (TB, n_pad)
    col = jax.lax.broadcasted_iota(jnp.int32, q.shape, 1)
    q = jnp.where(col < action_size, q, -jnp.inf)                 # mask padded lanes
    # NaN guard: treat NaN as maximal (matches torch argmax semantics) so the
    # returned index is always a valid action, never the padded sentinel.
    q = jnp.where(jnp.isnan(q), jnp.inf, q)
    m = jnp.max(q, axis=1, keepdims=True)
    # first index attaining the max (matches torch.max tie-breaking)
    idx = jnp.where(q == m, col, n_pad)
    a_ref[...] = jnp.min(idx, axis=1, keepdims=True).astype(jnp.int32)


# ---------------------------------------------------------------------------
# Wrappers
# ---------------------------------------------------------------------------
def _pick_tile(B):
    """Batch tile: ~B/2 (>=2 grid steps -> both v7x TCs), capped, sublane-rounded."""
    if B <= SUBLANE:
        return B                                   # tiny/latency path: exact block
    return min(MAX_BATCH_TILE, _round_up(pl.cdiv(B, 2), SUBLANE))


def _call(kernel, xp, w_pack, b_pack, out_width, out_dtype, flops):
    B, s_pad = xp.shape
    _, k_pad, n_pad = w_pack.shape
    tb = _pick_tile(B)

    x_bytes = xp.size * xp.dtype.itemsize
    w_bytes = w_pack.size * w_pack.dtype.itemsize
    b_bytes = b_pack.size * b_pack.dtype.itemsize
    out_itemsize = jnp.dtype(out_dtype).itemsize
    out_bytes = B * out_width * out_itemsize

    # Stated VMEM budget: double-buffered activation/output tiles + weights
    # (constant index_map -> fetched once) + margin.  Floor at 16 MiB (safe on
    # every generation), cap at v7x's 64 MiB physical.
    vmem_limit = (2 * (tb * s_pad * xp.dtype.itemsize + tb * out_width * out_itemsize)
                  + 2 * (w_bytes + b_bytes) + (4 << 20))
    vmem_limit = int(min(max(vmem_limit, 16 << 20), 64 << 20))

    cost = pl.CostEstimate(flops=flops, transcendentals=0,
                           bytes_accessed=x_bytes + w_bytes + b_bytes + out_bytes)

    return pl.pallas_call(
        kernel,
        out_shape=jax.ShapeDtypeStruct((B, out_width), out_dtype),
        grid=(pl.cdiv(B, tb),),
        in_specs=[
            pl.BlockSpec((tb, s_pad), lambda i: (i, 0)),            # batch-tiled acts
            pl.BlockSpec((3, k_pad, n_pad), lambda i: (0, 0, 0)),   # VMEM-resident W
            pl.BlockSpec((3, n_pad), lambda i: (0, 0)),             # VMEM-resident b
        ],
        out_specs=pl.BlockSpec((tb, out_width), lambda i: (i, 0)),
        compiler_params=pltpu.CompilerParams(
            dimension_semantics=("parallel",),
            vmem_limit_bytes=vmem_limit),
        cost_estimate=cost,
    )(xp, w_pack, b_pack)


def _pad_x(x, s_pad):
    return x if x.shape[1] == s_pad else jnp.pad(x, ((0, 0), (0, s_pad - x.shape[1])))


def _flops(B, dims):
    s, h, a = dims
    return 2 * B * (s * h + h * h + h * a)


def mlp_forward(x, params, *, out_dtype=jnp.float32, trim=True):
    """x: (B, state_size) f32 -> (B, action_size) Q-values (f32 by default).

    out_dtype=jnp.bfloat16 halves the dominant Q HBM write on v6e/v7x.
    trim=False returns the lane-padded (B, 128) Q (padded columns are exactly
    0) so the consumer can fuse the column slice instead of paying an extra
    XLA read+write pass over the padded array.
    """
    state_size, hidden, action_size = params["dims"]
    s_pad, n_pad = params["pads"]
    w_pack, b_pack = params["w_pack"], params["b_pack"]
    kernel = functools.partial(_mlp_kernel, s_pad=s_pad, n_pad=n_pad)
    q_pad = _call(kernel, _pad_x(x, s_pad), w_pack, b_pack, n_pad, out_dtype,
                  _flops(x.shape[0], params["dims"]))
    return q_pad[:, :action_size] if trim else q_pad


def select_action(state, params):
    """Greedy action. For a (1, state_size) input returns (1, 1) int32,
    matching MyModel.select_action (int32 instead of torch.long)."""
    if state.ndim == 1:
        state = state[None, :]
    state_size, hidden, action_size = params["dims"]
    s_pad, n_pad = params["pads"]
    w_pack, b_pack = params["w_pack"], params["b_pack"]
    kernel = functools.partial(_select_action_kernel, s_pad=s_pad, n_pad=n_pad,
                               action_size=action_size)
    return _call(kernel, _pad_x(state, s_pad), w_pack, b_pack, 1, jnp.int32,
                 _flops(state.shape[0], params["dims"]))


# ---------------------------------------------------------------------------
# Parameter construction / packing
# ---------------------------------------------------------------------------
def pack_params(w1, b1, w2, b2, w3, b3, dtype=jnp.float32):
    """Pack the three Linear layers into two lane-padded buffers.

    dtype=jnp.bfloat16 is recommended on v6e/v7x (halves weight DMA bytes);
    keep the f32 default on v5e (no native bf16 VPU, DMA saving is amortized).
    """
    state_size, hidden = w1.shape
    action_size = w3.shape[1]
    n_pad = _round_up(max(hidden, action_size), LANE)
    # s_pad follows the weight dtype's sublane packing so the in-kernel
    # w_ref[0, :s_pad, :] slice stays packed-tile aligned for bf16/int8.
    s_pad = _round_up(state_size, _sublane_pack(dtype))
    k_pad = max(s_pad, n_pad)

    w_pack = jnp.zeros((3, k_pad, n_pad), dtype)
    w_pack = w_pack.at[0, :state_size, :hidden].set(w1.astype(dtype))
    w_pack = w_pack.at[1, :hidden, :hidden].set(w2.astype(dtype))
    w_pack = w_pack.at[2, :hidden, :action_size].set(w3.astype(dtype))

    b_pack = jnp.zeros((3, n_pad), jnp.float32)
    b_pack = b_pack.at[0, :hidden].set(b1.astype(jnp.float32))
    b_pack = b_pack.at[1, :hidden].set(b2.astype(jnp.float32))
    b_pack = b_pack.at[2, :action_size].set(b3.astype(jnp.float32))

    return {"w_pack": w_pack, "b_pack": b_pack,
            "dims": (state_size, hidden, action_size),
            "pads": (s_pad, n_pad),
            "raw": (w1, b1, w2, b2, w3, b3)}


def init_params(key, state_size, action_size, hidden=64, dtype=jnp.float32):
    """PyTorch nn.Linear default init: U(-1/sqrt(fan_in), 1/sqrt(fan_in))."""
    def linear(k, fan_in, fan_out):
        kw, kb = jax.random.split(k)
        bound = 1.0 / float(fan_in) ** 0.5
        w = jax.random.uniform(kw, (fan_in, fan_out), jnp.float32, -bound, bound)
        b = jax.random.uniform(kb, (fan_out,), jnp.float32, -bound, bound)
        return w, b

    k1, k2, k3 = jax.random.split(key, 3)
    w1, b1 = linear(k1, state_size, hidden)
    w2, b2 = linear(k2, hidden, hidden)
    w3, b3 = linear(k3, hidden, action_size)
    return pack_params(w1, b1, w2, b2, w3, b3, dtype=dtype)


# ---------------------------------------------------------------------------
if __name__ == "__main__":
    state_size, action_size, batch = 32, 8, 8

    key = jax.random.PRNGKey(0)
    kp, kx = jax.random.split(key)
    params = init_params(kp, state_size, action_size)
    x = jax.random.normal(kx, (batch, state_size), jnp.float32)

    # Q-value path (default: f32, trimmed -> exact forward() semantics).
    q = mlp_forward(x, params)
    jax.block_until_ready(q)
    assert q.shape == (batch, action_size)

    # Plain-JAX reference (same default matmul precision).
    w1, b1, w2, b2, w3, b3 = params["raw"]
    h1 = jnp.maximum(x @ w1 + b1, 0.0)
    h2 = jnp.maximum(h1 @ w2 + b2, 0.0)
    ref = h2 @ w3 + b3
    assert jnp.allclose(q, ref, atol=1e-5, rtol=1e-5), float(jnp.max(jnp.abs(q - ref)))

    # Untrimmed path: padded columns are exactly 0, real columns match.
    q_pad = mlp_forward(x, params, trim=False)
    jax.block_until_ready(q_pad)
    assert q_pad.shape[1] == params["pads"][1]
    assert jnp.allclose(q_pad[:, :action_size], ref, atol=1e-5, rtol=1e-5)
    assert jnp.all(q_pad[:, action_size:] == 0.0)

    # Fused argmax path on a batch of states ...
    acts = select_action(x, params)
    jax.block_until_ready(acts)
    assert acts.shape == (batch, 1)
    assert jnp.array_equal(acts[:, 0], jnp.argmax(ref, axis=1).astype(jnp.int32))

    # ... and the single-state (1, 1) signature of MyModel.select_action.
    a = select_action(x[:1], params)
    jax.block_until_ready(a)
    assert a.shape == (1, 1) and a.dtype == jnp.int32
    assert int(a[0, 0]) == int(jnp.argmax(ref[0]))

    print("KERNEL_OK")
</pallas_src>

<mosaic_0001>
module attributes {stable_mosaic.version = 11 : i64} {
  func.func @_mlp_kernel(%arg0: i32, %arg1: memref<8x32xf32, #tpu.memory_space<vmem>>, %arg2: memref<3x128x128xf32, #tpu.memory_space<vmem>>, %arg3: memref<3x128xf32, #tpu.memory_space<vmem>>, %arg4: memref<8x128xf32, #tpu.memory_space<vmem>>) attributes {dimension_semantics = [#tpu.dimension_semantics<parallel>], iteration_bounds = array<i64: 1>, scalar_prefetch = 0 : i64, scratch_operands = 0 : i64, tpu.core_type = #tpu.core_type<tc>, window_params = [{transform_indices = @transform_0, window_bounds = array<i64: 8, 32>}, {pipeline_mode = #tpu.pipeline_mode<synchronous>, transform_indices = @transform_1, window_bounds = array<i64: 3, 128, 128>}, {pipeline_mode = #tpu.pipeline_mode<synchronous>, transform_indices = @transform_2, window_bounds = array<i64: 3, 128>}, {transform_indices = @transform_3, window_bounds = array<i64: 8, 128>}]} {
    %c0 = arith.constant 0 : index
    %c0_0 = arith.constant 0 : index
    %0 = vector.load %arg3[%c0, %c0_0] : memref<3x128xf32, #tpu.memory_space<vmem>>, vector<3x128xf32>
    %c0_1 = arith.constant 0 : index
    %c0_2 = arith.constant 0 : index
    %1 = vector.load %arg1[%c0_1, %c0_2] : memref<8x32xf32, #tpu.memory_space<vmem>>, vector<8x32xf32>
    %c0_3 = arith.constant 0 : index
    %c0_4 = arith.constant 0 : index
    %c0_5 = arith.constant 0 : index
    %2 = vector.load %arg2[%c0_3, %c0_4, %c0_5] : memref<3x128x128xf32, #tpu.memory_space<vmem>>, vector<1x32x128xf32>
    %3 = vector.shape_cast %2 : vector<1x32x128xf32> to vector<32x128xf32>
    %cst = arith.constant dense<0.000000e+00> : vector<8x128xf32>
    %4 = tpu.matmul %1, %3, %cst {dimension_numbers = #tpu.dot_dimension_numbers<[1], [0], [0], [1], [0, 0, 1, 1], [], []>} : vector<8x32xf32>, vector<32x128xf32>, vector<8x128xf32> -> vector<8x128xf32>
    %5 = vector.extract_strided_slice %0 {offsets = [0, 0], sizes = [1, 128], strides = [1, 1]} : vector<3x128xf32> to vector<1x128xf32>
    %6 = vector.broadcast %5 : vector<1x128xf32> to vector<8x128xf32>
    %7 = arith.addf %4, %6 : vector<8x128xf32>
    %cst_6 = arith.constant 0.000000e+00 : f32
    %8 = vector.broadcast %cst_6 : f32 to vector<8x128xf32>
    %9 = arith.maximumf %7, %8 : vector<8x128xf32>
    %c1 = arith.constant 1 : index
    %c0_7 = arith.constant 0 : index
    %c0_8 = arith.constant 0 : index
    %10 = vector.load %arg2[%c1, %c0_7, %c0_8] : memref<3x128x128xf32, #tpu.memory_space<vmem>>, vector<1x128x128xf32>
    %11 = vector.shape_cast %10 : vector<1x128x128xf32> to vector<128x128xf32>
    %cst_9 = arith.constant dense<0.000000e+00> : vector<8x128xf32>
    %12 = tpu.matmul %9, %11, %cst_9 {dimension_numbers = #tpu.dot_dimension_numbers<[1], [0], [0], [1], [0, 0, 1, 1], [], []>} : vector<8x128xf32>, vector<128x128xf32>, vector<8x128xf32> -> vector<8x128xf32>
    %13 = vector.extract_strided_slice %0 {offsets = [1, 0], sizes = [1, 128], strides = [1, 1]} : vector<3x128xf32> to vector<1x128xf32>
    %14 = vector.broadcast %13 : vector<1x128xf32> to vector<8x128xf32>
    %15 = arith.addf %12, %14 : vector<8x128xf32>
    %cst_10 = arith.constant 0.000000e+00 : f32
    %16 = vector.broadcast %cst_10 : f32 to vector<8x128xf32>
    %17 = arith.maximumf %15, %16 : vector<8x128xf32>
    %c2 = arith.constant 2 : index
    %c0_11 = arith.constant 0 : index
    %c0_12 = arith.constant 0 : index
    %18 = vector.load %arg2[%c2, %c0_11, %c0_12] : memref<3x128x128xf32, #tpu.memory_space<vmem>>, vector<1x128x128xf32>
    %19 = vector.shape_cast %18 : vector<1x128x128xf32> to vector<128x128xf32>
    %cst_13 = arith.constant dense<0.000000e+00> : vector<8x128xf32>
    %20 = tpu.matmul %17, %19, %cst_13 {dimension_numbers = #tpu.dot_dimension_numbers<[1], [0], [0], [1], [0, 0, 1, 1], [], []>} : vector<8x128xf32>, vector<128x128xf32>, vector<8x128xf32> -> vector<8x128xf32>
    %21 = vector.extract_strided_slice %0 {offsets = [2, 0], sizes = [1, 128], strides = [1, 1]} : vector<3x128xf32> to vector<1x128xf32>
    %22 = vector.broadcast %21 : vector<1x128xf32> to vector<8x128xf32>
    %23 = arith.addf %20, %22 : vector<8x128xf32>
    %c0_14 = arith.constant 0 : index
    %c0_15 = arith.constant 0 : index
    %24 = vector.load %arg4[%c0_14, %c0_15] : memref<8x128xf32, #tpu.memory_space<vmem>>, vector<8x128xf32>
    tpu.vector_store %arg4[%c0_14, %c0_15], %23 {strides = array<i32>} : memref<8x128xf32, #tpu.memory_space<vmem>>, vector<8x128xf32>,
    return
  }
  func.func @transform_0(%arg0: i32) -> (i32, i32) {
    %c0_i32 = arith.constant 0 : i32
    %c0_i32_0 = arith.constant 0 : i32
    return %arg0, %c0_i32 : i32, i32
  }
  func.func @transform_1(%arg0: i32) -> (i32, i32, i32) {
    %c0_i32 = arith.constant 0 : i32
    %c0_i32_0 = arith.constant 0 : i32
    %c0_i32_1 = arith.constant 0 : i32
    %c0_i32_2 = arith.constant 0 : i32
    return %c0_i32, %c0_i32_0, %c0_i32_1 : i32, i32, i32
  }
  func.func @transform_2(%arg0: i32) -> (i32, i32) {
    %c0_i32 = arith.constant 0 : i32
    %c0_i32_0 = arith.constant 0 : i32
    %c0_i32_1 = arith.constant 0 : i32
    return %c0_i32, %c0_i32_0 : i32, i32
  }
  func.func @transform_3(%arg0: i32) -> (i32, i32) {
    %c0_i32 = arith.constant 0 : i32
    %c0_i32_0 = arith.constant 0 : i32
    return %arg0, %c0_i32 : i32, i32
  }
}

</mosaic_0001>

<llo_original>
// kernel: tpu_custom_call.1
$region0: #{tpu_custom_call.1}
  #allocation0 [shape = 'u32[]', space=smem, size = 0x4, offset = 0x4, fixed_abs, tag = 'smem constant byte address 0x4 - core index']
  #allocation1 [shape = 'u32[144,128]{1,0:T(1,128)}', space=vmem, size = 0x12000, scoped, tag = 'internal scratch']
  %s0 = inlined_call_operand.hbm [shape: f32[8,32], index: 0, kind: input, shape index: {}]
  %s1 = inlined_call_operand.hbm [shape: f32[3,128,128], index: 1, kind: input, shape index: {}]
  %s2 = inlined_call_operand.hbm [shape: f32[3,128], index: 2, kind: input, shape index: {}]
  %s3 = inlined_call_operand.hbm [shape: f32[8,128], index: 3, kind: output, shape index: {}]
  %s4 = sld [smem:[#allocation0]]
  $region34: #{tpu_custom_call.1} parent=0
    _
  %s6 = ssub.s32 1, %s4
  %s7 = scalar_select 0, %s6, %s4
  $region1: #{tpu_custom_call.1} parent=0
    #allocation2 [shape = 'u8[4096]{0}', space=vmem, size = 0x1000, scoped, tag = 'input window, operand 0, single buffered']
    #allocation3 [shape = 's32[1]{0}', space=sflag, size = 0x4, scoped, tag = 'scoped memory for tpu_custom_call.1']
    #allocation4 [shape = 's32[1]{0}', space=sflag, size = 0x4, scoped, tag = 'scoped memory for tpu_custom_call.1']
    #allocation5 [shape = 'u8[196608]{0}', space=vmem, size = 0x30000, scoped, tag = 'input window, operand 1, single buffered']
    #allocation6 [shape = 's32[1]{0}', space=sflag, size = 0x4, scoped, tag = 'scoped memory for tpu_custom_call.1']
    #allocation7 [shape = 'u8[2048]{0}', space=vmem, size = 0x800, scoped, tag = 'input window, operand 2, single buffered']
    #allocation8 [shape = 'u8[4096]{0}', space=vmem, size = 0x1000, scoped, tag = 'output window, operand 0, single buffered']
    %8 = vsyncpa [#allocation3], 0
    %9 = vsyncpa [#allocation6], 0
    %10 = vsyncpa [#allocation4], 0
    // Predicated region
    $region2: #{tpu_custom_call.1} parent=1 // pred_check
      _
    $region3: #{tpu_custom_call.1} parent=1 // pred_check_branch
      %12 = sbr.rel (0) target = $region5
    $region4: #{tpu_custom_call.1} parent=1 // pred_region
      %s14 = ssub.s32 128, 128
      %15 = vsyncadd [#allocation3], %s14
      %s17 = sshll.u32 [#allocation2], 4
      %s18 = int_to_ptr.vmem [resolvable:$true] %s17
      %20 = dma.hbm_to_vmem [thread:$0]  %s0, 128, %s18, [#allocation3]
    $region5: #{tpu_custom_call.1} parent=1 // pred_fallthru
      _
    // Predicated region
    $region6: #{tpu_custom_call.1} parent=1 // pred_check
      _
    $region7: #{tpu_custom_call.1} parent=1 // pred_check_branch
      %22 = sbr.rel (0) target = $region9
    $region8: #{tpu_custom_call.1} parent=1 // pred_region
      %s24 = ssub.s32 6144, 6144
      %25 = vsyncadd [#allocation6], %s24
      %s26 = sshll.u32 [#allocation5], 4
      %s27 = int_to_ptr.vmem [resolvable:$true] %s26
      %32 = dma.hbm_to_vmem [thread:$0]  %s1, 6144, %s27, [#allocation6], 128, 128, 8
    $region9: #{tpu_custom_call.1} parent=1 // pred_fallthru
      _
    // Predicated region
    $region10: #{tpu_custom_call.1} parent=1 // pred_check
      _
    $region11: #{tpu_custom_call.1} parent=1 // pred_check_branch
      %34 = sbr.rel (0) target = $region13
    $region12: #{tpu_custom_call.1} parent=1 // pred_region
      %s36 = ssub.s32 64, 64
      %37 = vsyncadd [#allocation6], %s36
      %s39 = sshll.u32 [#allocation7], 4
      %s40 = int_to_ptr.vmem [resolvable:$true] %s39
      %42 = dma.hbm_to_vmem [thread:$0]  %s2, 64, %s40, [#allocation6]
    $region13: #{tpu_custom_call.1} parent=1 // pred_fallthru
      _
    // Predicated region
    $region14: #{tpu_custom_call.1} parent=1 // pred_check
      _
    $region15: #{tpu_custom_call.1} parent=1 // pred_check_branch
      %44 = sbr.rel (0) target = $region17
    $region16: #{tpu_custom_call.1} parent=1 // pred_region
      %45 = dma.done [#allocation3], 128
    $region17: #{tpu_custom_call.1} parent=1 // pred_fallthru
      _
    // Predicated region
    $region18: #{tpu_custom_call.1} parent=1 // pred_check
      _
    $region19: #{tpu_custom_call.1} parent=1 // pred_check_branch
      %47 = sbr.rel (0) target = $region21
    $region20: #{tpu_custom_call.1} parent=1 // pred_region
      %48 = dma.done [#allocation6], 6144
    $region21: #{tpu_custom_call.1} parent=1 // pred_fallthru
      _
    // Predicated region
    $region22: #{tpu_custom_call.1} parent=1 // pred_check
      _
    $region23: #{tpu_custom_call.1} parent=1 // pred_check_branch
      %50 = sbr.rel (0) target = $region25
    $region24: #{tpu_custom_call.1} parent=1 // pred_region
      %51 = dma.done [#allocation6], 64
    $region25: #{tpu_custom_call.1} parent=1 // pred_fallthru
      _
    %v52 = vld [vmem:[#allocation7] sm:$0x7]
    %v53 = vld [vmem:[#allocation2] sm:$0xff]
    %v54 = vld [vmem:[#allocation5] sm:$0xff]
    %v55 = vld [vmem:[#allocation5 + $0x8] sm:$0xff]
    %v56 = vld [vmem:[#allocation5 + $0x10] sm:$0xff]
    %v57 = vld [vmem:[#allocation5 + $0x18] sm:$0xff]
    %v58 = vlaneseq
    %v59 = vshrl.u32 %v58, 7
    %v60 = vsub.s32 0, %v59
    %v61 = vrot.slane %v52, %v60
    %vm62 = vcmask 261120
    %v64 = vsel %vm62, %v53, 0
    %66 = vmatprep.subr.mxu0 0.0
    %67 = vmatpush1.msra.mxu0 0.0
    %68 = vmatprep.subr.mxu0 0.0
    %69 = vmatpush1.msra.mxu0 0.0
    %70 = vmatprep.subr.mxu0 0.0
    %71 = vmatpush1.msra.mxu0 0.0
    %72 = vmatprep.subr.mxu0 0.0
    %73 = vmatpush1.msra.mxu0 0.0
    %74 = vmatprep.subr.mxu0 0.0
    %75 = vmatpush1.msra.mxu0 0.0
    %76 = vmatprep.subr.mxu0 0.0
    %77 = vmatpush1.msra.mxu0 0.0
    %78 = vmatprep.subr.mxu0 0.0
    %79 = vmatpush1.msra.mxu0 0.0
    %80 = vmatprep.subr.mxu0 0.0
    %81 = vmatpush1.msra.mxu0 0.0
    %82 = vmatprep.subr.mxu0 0.0
    %83 = vmatpush1.msra.mxu0 0.0
    %84 = vmatprep.subr.mxu0 0.0
    %85 = vmatpush1.msra.mxu0 0.0
    %86 = vmatprep.subr.mxu0 0.0
    %87 = vmatpush1.msra.mxu0 0.0
    %88 = vmatprep.subr.mxu0 0.0
    %89 = vmatpush1.msra.mxu0 0.0
    %90 = vmatprep.subr.mxu0 0.0
    %91 = vmatpush1.msra.mxu0 %v57
    %92 = vmatprep.subr.mxu0 0.0
    %93 = vmatpush1.msra.mxu0 %v56
    %94 = vmatprep.subr.mxu0 0.0
    %95 = vmatpush1.msra.mxu0 %v55
    %96 = vmatprep.subr.mxu0 0.0
    %97 = vmatpush1.msra.mxu0 %v54
    %98 = vmatprep.subr.mxu0 0.0
    %99 = vmatpush2.msra.mxu0 0.0
    %100 = vmatprep.subr.mxu0 0.0
    %101 = vmatpush2.msra.mxu0 0.0
    %102 = vmatprep.subr.mxu0 0.0
    %103 = vmatpush2.msra.mxu0 0.0
    %104 = vmatprep.subr.mxu0 0.0
    %105 = vmatpush2.msra.mxu0 0.0
    %106 = vmatprep.subr.mxu0 0.0
    %107 = vmatpush2.msra.mxu0 0.0
    %108 = vmatprep.subr.mxu0 0.0
    %109 = vmatpush2.msra.mxu0 0.0
    %110 = vmatprep.subr.mxu0 0.0
    %111 = vmatpush2.msra.mxu0 0.0
    %112 = vmatprep.subr.mxu0 0.0
    %113 = vmatpush2.msra.mxu0 0.0
    %114 = vmatprep.subr.mxu0 0.0
    %115 = vmatpush2.msra.mxu0 0.0
    %116 = vmatprep.subr.mxu0 0.0
    %117 = vmatpush2.msra.mxu0 0.0
    %118 = vmatprep.subr.mxu0 0.0
    %119 = vmatpush2.msra.mxu0 0.0
    %120 = vmatprep.subr.mxu0 0.0
    %121 = vmatpush2.msra.mxu0 0.0
    %122 = vmatprep.subr.mxu0 0.0
    %123 = vmatpush2.msra.mxu0 0.0
    %124 = vmatprep.subr.mxu0 0.0
    %125 = vmatpush2.msra.mxu0 0.0
    %126 = vmatprep.subr.mxu0 0.0
    %127 = vmatpush2.msra.mxu0 0.0
    %128 = vmatprep.subr.mxu0 0.0
    %129 = vmatpush2.msra.mxu0 0.0
    %130 = vmatprep.mubr.f32.mxu0 0.0
    %131 = vmatmul.mubr.f32.gmra.mxu0 %v64
    %v132 = vpop.f32.mrf.mxu0
    %v133 = vadd.f32 %v61, %v132
    %v134 = vpop.f32.mrf.mxu0
    %135 = vdwg.mxu0
    %v136 = vmax.f32 %v133, 0.0
    %s137 = scalar_lea.vmem [#allocation5], 128
    %v138 = vld [vmem:[%s137] sm:$0xff]
    %v139 = vld [vmem:[%s137 + $0x8] sm:$0xff]
    %v140 = vld [vmem:[%s137 + $0x10] sm:$0xff]
    %v141 = vld [vmem:[%s137 + $0x18] sm:$0xff]
    %v142 = vld [vmem:[%s137 + $0x20] sm:$0xff]
    %v143 = vld [vmem:[%s137 + $0x28] sm:$0xff]
    %v144 = vld [vmem:[%s137 + $0x30] sm:$0xff]
    %v145 = vld [vmem:[%s137 + $0x38] sm:$0xff]
    %v146 = vld [vmem:[%s137 + $0x40] sm:$0xff]
    %v147 = vld [vmem:[%s137 + $0x48] sm:$0xff]
    %v148 = vld [vmem:[%s137 + $0x50] sm:$0xff]
    %v149 = vld [vmem:[%s137 + $0x58] sm:$0xff]
    %v150 = vld [vmem:[%s137 + $0x60] sm:$0xff]
    %v151 = vld [vmem:[%s137 + $0x68] sm:$0xff]
    %v152 = vld [vmem:[%s137 + $0x70] sm:$0xff]
    %v153 = vld [vmem:[%s137 + $0x78] sm:$0xff]
    %v154 = vlaneseq
    %v155 = vshrl.u32 %v154, 7
    %v156 = vsub.s32 1, %v155
    %v157 = vrot.slane %v52, %v156
    %158 = vmatprep.subr.mxu0 0.0
    %159 = vmatpush1.msra.mxu0 %v153
    %160 = vmatprep.subr.mxu0 0.0
    %161 = vmatpush1.msra.mxu0 %v152
    %162 = vmatprep.subr.mxu0 0.0
    %163 = vmatpush1.msra.mxu0 %v151
    %164 = vmatprep.subr.mxu0 0.0
    %165 = vmatpush1.msra.mxu0 %v150
    %166 = vmatprep.subr.mxu0 0.0
    %167 = vmatpush1.msra.mxu0 %v149
    %168 = vmatprep.subr.mxu0 0.0
    %169 = vmatpush1.msra.mxu0 %v148
    %170 = vmatprep.subr.mxu0 0.0
    %171 = vmatpush1.msra.mxu0 %v147
    %172 = vmatprep.subr.mxu0 0.0
    %173 = vmatpush1.msra.mxu0 %v146
    %174 = vmatprep.subr.mxu0 0.0
    %175 = vmatpush1.msra.mxu0 %v145
    %176 = vmatprep.subr.mxu0 0.0
    %177 = vmatpush1.msra.mxu0 %v144
    %178 = vmatprep.subr.mxu0 0.0
    %179 = vmatpush1.msra.mxu0 %v143
    %180 = vmatprep.subr.mxu0 0.0
    %181 = vmatpush1.msra.mxu0 %v142
    %182 = vmatprep.subr.mxu0 0.0
    %183 = vmatpush1.msra.mxu0 %v141
    %184 = vmatprep.subr.mxu0 0.0
    %185 = vmatpush1.msra.mxu0 %v140
    %186 = vmatprep.subr.mxu0 0.0
    %187 = vmatpush1.msra.mxu0 %v139
    %188 = vmatprep.subr.mxu0 0.0
    %189 = vmatpush1.msra.mxu0 %v138
    %190 = vmatprep.subr.mxu0 0.0
    %191 = vmatpush2.msra.mxu0 0.0
    %192 = vmatprep.subr.mxu0 0.0
    %193 = vmatpush2.msra.mxu0 0.0
    %194 = vmatprep.subr.mxu0 0.0
    %195 = vmatpush2.msra.mxu0 0.0
    %196 = vmatprep.subr.mxu0 0.0
    %197 = vmatpush2.msra.mxu0 0.0
    %198 = vmatprep.subr.mxu0 0.0
    %199 = vmatpush2.msra.mxu0 0.0
    %200 = vmatprep.subr.mxu0 0.0
    %201 = vmatpush2.msra.mxu0 0.0
    %202 = vmatprep.subr.mxu0 0.0
    %203 = vmatpush2.msra.mxu0 0.0
    %204 = vmatprep.subr.mxu0 0.0
    %205 = vmatpush2.msra.mxu0 0.0
    %206 = vmatprep.subr.mxu0 0.0
    %207 = vmatpush2.msra.mxu0 0.0
    %208 = vmatprep.subr.mxu0 0.0
    %209 = vmatpush2.msra.mxu0 0.0
    %210 = vmatprep.subr.mxu0 0.0
    %211 = vmatpush2.msra.mxu0 0.0
    %212 = vmatprep.subr.mxu0 0.0
    %213 = vmatpush2.msra.mxu0 0.0
    %214 = vmatprep.subr.mxu0 0.0
    %215 = vmatpush2.msra.mxu0 0.0
    %216 = vmatprep.subr.mxu0 0.0
    %217 = vmatpush2.msra.mxu0 0.0
    %218 = vmatprep.subr.mxu0 0.0
    %219 = vmatpush2.msra.mxu0 0.0
    %220 = vmatprep.subr.mxu0 0.0
    %221 = vmatpush2.msra.mxu0 0.0
    %222 = vmatprep.mubr.f32.mxu0 0.0
    %223 = vmatmul.mubr.f32.gmra.mxu0 %v136
    %v224 = vpop.f32.mrf.mxu0
    %v225 = vadd.f32 %v157, %v224
    %v226 = vpop.f32.mrf.mxu0
    %227 = vdwg.mxu0
    %v228 = vmax.f32 %v225, 0.0
    %s229 = scalar_lea.vmem [#allocation5], 256
    %v230 = vld [vmem:[%s229] sm:$0xff]
    %v231 = vld [vmem:[%s229 + $0x8] sm:$0xff]
    %v232 = vld [vmem:[%s229 + $0x10] sm:$0xff]
    %v233 = vld [vmem:[%s229 + $0x18] sm:$0xff]
    %v234 = vld [vmem:[%s229 + $0x20] sm:$0xff]
    %v235 = vld [vmem:[%s229 + $0x28] sm:$0xff]
    %v236 = vld [vmem:[%s229 + $0x30] sm:$0xff]
    %v237 = vld [vmem:[%s229 + $0x38] sm:$0xff]
    %v238 = vld [vmem:[%s229 + $0x40] sm:$0xff]
    %v239 = vld [vmem:[%s229 + $0x48] sm:$0xff]
    %v240 = vld [vmem:[%s229 + $0x50] sm:$0xff]
    %v241 = vld [vmem:[%s229 + $0x58] sm:$0xff]
    %v242 = vld [vmem:[%s229 + $0x60] sm:$0xff]
    %v243 = vld [vmem:[%s229 + $0x68] sm:$0xff]
    %v244 = vld [vmem:[%s229 + $0x70] sm:$0xff]
    %v245 = vld [vmem:[%s229 + $0x78] sm:$0xff]
    %v246 = vlaneseq
    %v247 = vshrl.u32 %v246, 7
    %v248 = vsub.s32 2, %v247
    %v249 = vrot.slane %v52, %v248
    %250 = vmatprep.subr.mxu0 0.0
    %251 = vmatpush1.msra.mxu0 %v245
    %252 = vmatprep.subr.mxu0 0.0
    %253 = vmatpush1.msra.mxu0 %v244
    %254 = vmatprep.subr.mxu0 0.0
    %255 = vmatpush1.msra.mxu0 %v243
    %256 = vmatprep.subr.mxu0 0.0
    %257 = vmatpush1.msra.mxu0 %v242
    %258 = vmatprep.subr.mxu0 0.0
    %259 = vmatpush1.msra.mxu0 %v241
    %260 = vmatprep.subr.mxu0 0.0
    %261 = vmatpush1.msra.mxu0 %v240
    %262 = vmatprep.subr.mxu0 0.0
    %263 = vmatpush1.msra.mxu0 %v239
    %264 = vmatprep.subr.mxu0 0.0
    %265 = vmatpush1.msra.mxu0 %v238
    %266 = vmatprep.subr.mxu0 0.0
    %267 = vmatpush1.msra.mxu0 %v237
    %268 = vmatprep.subr.mxu0 0.0
    %269 = vmatpush1.msra.mxu0 %v236
    %270 = vmatprep.subr.mxu0 0.0
    %271 = vmatpush1.msra.mxu0 %v235
    %272 = vmatprep.subr.mxu0 0.0
    %273 = vmatpush1.msra.mxu0 %v234
    %274 = vmatprep.subr.mxu0 0.0
    %275 = vmatpush1.msra.mxu0 %v233
    %276 = vmatprep.subr.mxu0 0.0
    %277 = vmatpush1.msra.mxu0 %v232
    %278 = vmatprep.subr.mxu0 0.0
    %279 = vmatpush1.msra.mxu0 %v231
    %280 = vmatprep.subr.mxu0 0.0
    %281 = vmatpush1.msra.mxu0 %v230
    %282 = vmatprep.subr.mxu0 0.0
    %283 = vmatpush2.msra.mxu0 0.0
    %284 = vmatprep.subr.mxu0 0.0
    %285 = vmatpush2.msra.mxu0 0.0
    %286 = vmatprep.subr.mxu0 0.0
    %287 = vmatpush2.msra.mxu0 0.0
    %288 = vmatprep.subr.mxu0 0.0
    %289 = vmatpush2.msra.mxu0 0.0
    %290 = vmatprep.subr.mxu0 0.0
    %291 = vmatpush2.msra.mxu0 0.0
    %292 = vmatprep.subr.mxu0 0.0
    %293 = vmatpush2.msra.mxu0 0.0
    %294 = vmatprep.subr.mxu0 0.0
    %295 = vmatpush2.msra.mxu0 0.0
    %296 = vmatprep.subr.mxu0 0.0
    %297 = vmatpush2.msra.mxu0 0.0
    %298 = vmatprep.subr.mxu0 0.0
    %299 = vmatpush2.msra.mxu0 0.0
    %300 = vmatprep.subr.mxu0 0.0
    %301 = vmatpush2.msra.mxu0 0.0
    %302 = vmatprep.subr.mxu0 0.0
    %303 = vmatpush2.msra.mxu0 0.0
    %304 = vmatprep.subr.mxu0 0.0
    %305 = vmatpush2.msra.mxu0 0.0
    %306 = vmatprep.subr.mxu0 0.0
    %307 = vmatpush2.msra.mxu0 0.0
    %308 = vmatprep.subr.mxu0 0.0
    %309 = vmatpush2.msra.mxu0 0.0
    %310 = vmatprep.subr.mxu0 0.0
    %311 = vmatpush2.msra.mxu0 0.0
    %312 = vmatprep.subr.mxu0 0.0
    %313 = vmatpush2.msra.mxu0 0.0
    %314 = vmatprep.mubr.f32.mxu0 0.0
    %315 = vmatmul.mubr.f32.gmra.mxu0 %v228
    %v316 = vpop.f32.mrf.mxu0
    %v317 = vadd.f32 %v249, %v316
    %v318 = vpop.f32.mrf.mxu0
    %319 = vdwg.mxu0
    %320 = vst [vmem:[#allocation8] sm:$0xff] %v317
    // Predicated region
    $region26: #{tpu_custom_call.1} parent=1 // pred_check
      _
    $region27: #{tpu_custom_call.1} parent=1 // pred_check_branch
      %322 = sbr.rel (0) target = $region29
    $region28: #{tpu_custom_call.1} parent=1 // pred_region
      %s324 = ssub.s32 128, 128
      %325 = vsyncadd [#allocation4], %s324
      %s327 = sshll.u32 [#allocation8], 4
      %s328 = int_to_ptr.vmem [resolvable:$true] %s327
      %330 = dma.vmem_to_hbm [thread:$0]  %s328, 128, %s3, [#allocation4]
    $region29: #{tpu_custom_call.1} parent=1 // pred_fallthru
      _
    // Predicated region
    $region30: #{tpu_custom_call.1} parent=1 // pred_check
      _
    $region31: #{tpu_custom_call.1} parent=1 // pred_check_branch
      %332 = sbr.rel (0) target = $region33
    $region32: #{tpu_custom_call.1} parent=1 // pred_region
      %333 = dma.done [#allocation4], 128
    $region33: #{tpu_custom_call.1} parent=1 // pred_fallthru
      _
    %334 = vsyncpa [#allocation3], 1
    %335 = vsyncpa [#allocation6], 1
    %336 = vsyncpa [#allocation4], 1

</llo_original>
